<compile_context>
chip_gen: v7x
topology: tpu7x:2x2x1
jax: 0.10.0
libtpu: 0.0.40
codegen_flags: <defaults>
</compile_context>

<pallas_src>
import functools

import jax
import jax.numpy as jnp
from jax.experimental import pallas as pl
from jax.experimental.pallas import tpu as pltpu

NUM_STEPS = 16                      # self.num_steps in the PyTorch module
_TB_MAX = 512                       # max batch-tile rows
_TK_MAX = 4096                      # max reduction-tile cols (f32 x tile = 8 MiB)
_W_RESIDENT_MAX_BYTES = 4 << 20     # keep W fully VMEM-resident below this


def _round_up(a, m):
    return (a + m - 1) // m * m


def _cdiv(a, b):
    return (a + b - 1) // b


def _amp_scale_kernel(label_ref, x_ref, w_ref, b_ref, out_ref, acc_ref, *,
                      n_rows, n_cols, tb, tk, w_resident):
    """Fused tiled linear + cross-entropy + argmax-correctness kernel.

    label_ref : SMEM (1,)              int32    -- shared class label (scalar prefetch)
    x_ref     : VMEM (TB, TK)          float32  -- tile of flattened signal (cast in-kernel)
    w_ref     : VMEM (16, D_pad|TK)    bfloat16 -- lane-dense weight (resident or streamed)
    b_ref     : VMEM (1, 16)           float32  -- Linear bias
    out_ref   : VMEM (8, 128)          float32  -- per-tile stats: [0,0]=loss sum, [0,1]=#correct
    acc_ref   : VMEM (TB, 16) scratch  float32  -- logits accumulator over K tiles
    """
    i = pl.program_id(0)
    k = pl.program_id(1)
    nk = pl.num_programs(1)

    @pl.when(k == 0)
    def _():
        acc_ref[...] = jnp.zeros_like(acc_ref)

    if w_resident:
        # Full weight lives in VMEM (constant index_map -> DMA'd once); slice this K tile.
        w_tile = w_ref[:, pl.ds(pl.multiple_of(k * tk, tk), tk)]          # (16, tk) bf16
    else:
        w_tile = w_ref[...]                                               # (16, tk) bf16

    def _accumulate(x_f32):
        # Cast to bf16 right before the MXU (never feed f32 to the dot).
        x_bf = x_f32.astype(jnp.bfloat16)
        acc_ref[...] += jax.lax.dot_general(
            x_bf, w_tile,
            dimension_numbers=(((1,), (1,)), ((), ())),
            preferred_element_type=jnp.float32)

    ragged_k = (n_cols % tk) != 0        # static

    @pl.when(k < nk - 1)
    def _():
        _accumulate(x_ref[...])

    @pl.when(k == nk - 1)
    def _():
        x = x_ref[...]
        if ragged_k:
            # Mask garbage columns of the ragged last K block (only step that needs it).
            col = jax.lax.broadcasted_iota(jnp.int32, x.shape, 1) + k * tk
            x = jnp.where(col < n_cols, x, 0.0)
        _accumulate(x)

        # ---------------- epilogue (once per batch tile) ----------------
        z = acc_ref[...] + b_ref[...]                                     # (tb, 16) f32
        label = label_ref[0]
        n_cls = z.shape[1]
        cls = jax.lax.broadcasted_iota(jnp.int32, z.shape, 1)

        # Numerically stable log-sum-exp cross entropy against the shared label.
        m = jnp.max(z, axis=-1, keepdims=True)                            # (tb, 1)
        lse = m + jnp.log(jnp.sum(jnp.exp(z - m), axis=-1, keepdims=True))
        z_label = jnp.sum(jnp.where(cls == label, z, 0.0), axis=-1, keepdims=True)
        loss = lse - z_label                                              # (tb, 1)

        # argmax == smallest column attaining the row max (matches torch/jnp argmax).
        pred = jnp.min(jnp.where(z == m, cls, n_cls), axis=-1, keepdims=True)
        correct = (pred == label).astype(jnp.float32)                     # (tb, 1)

        # Mask padded batch rows, reduce to per-tile sums, emit one lane-dense block.
        row = jax.lax.broadcasted_iota(jnp.int32, (tb, 1), 0) + i * tb
        valid = row < n_rows
        loss_sum = jnp.sum(jnp.where(valid, loss, 0.0), keepdims=True)    # (1, 1)
        corr_sum = jnp.sum(jnp.where(valid, correct, 0.0), keepdims=True)

        sub = jax.lax.broadcasted_iota(jnp.int32, (8, 128), 0)
        lane = jax.lax.broadcasted_iota(jnp.int32, (8, 128), 1)
        blk = jnp.where((sub == 0) & (lane == 0), loss_sum, 0.0)
        blk = jnp.where((sub == 0) & (lane == 1), corr_sum, blk)
        out_ref[...] = blk


@jax.jit
def amp_scale_predictor_forward(x, label, weight, bias):
    """JAX/Pallas equivalent of AmpScalePredictor.forward.

    x      : (B, C, T) float32
    label  : ()        int32 scalar class label
    weight : (D, NUM_STEPS) float32  (transposed torch Linear weight), D = C*T
    bias   : (NUM_STEPS,)   float32
    """
    B = x.shape[0]
    D = 1
    for s in x.shape[1:]:
        D *= s
    # flatten(start_dim=1); streamed to the kernel as-is (no extra pad/cast HBM pass).
    x_flat = x.reshape(B, D).astype(jnp.float32)

    # ---- adaptive tile sizes --------------------------------------------
    target_nb = _cdiv(B, _TB_MAX)
    if B >= 16:
        target_nb = max(target_nb, 2)   # >= 2 batch tiles keeps both v7x TensorCores busy
    TB = _round_up(_cdiv(B, target_nb), 8)
    nb = _cdiv(B, TB)

    D128 = _round_up(D, 128)
    TK = min(D128, _TK_MAX)
    nk = _cdiv(D, TK)
    D_pad_w = nk * TK

    w_resident = (NUM_STEPS * D_pad_w * 2) <= _W_RESIDENT_MAX_BYTES

    # ---- small operands (weight / bias / label): cheap to repack ---------
    w_bf = jnp.pad(weight.astype(jnp.bfloat16).T, ((0, 0), (0, D_pad_w - D)))  # (16, D_pad)
    bias2d = bias.reshape(1, NUM_STEPS).astype(jnp.float32)
    label_arr = jnp.reshape(label, (1,)).astype(jnp.int32)

    if w_resident:
        w_spec = pl.BlockSpec((NUM_STEPS, D_pad_w), lambda i, k, lbl: (0, 0))
    else:
        w_spec = pl.BlockSpec((NUM_STEPS, TK), lambda i, k, lbl: (0, k))

    # ---- VMEM budget (double-buffered f32 x + lane-dense W + accumulator) -
    x_buf = 2 * TB * TK * 4
    w_buf = 2 * NUM_STEPS * (D_pad_w if w_resident else TK) * 2
    acc_buf = TB * 128 * 4
    misc = 4 * 8 * 128 * 4
    vmem_limit = int((x_buf + w_buf + acc_buf + misc) * 1.4) + (2 << 20)
    vmem_limit = max(vmem_limit, 16 * 1024 * 1024)
    vmem_limit = min(vmem_limit, 48 * 1024 * 1024)   # safe on v7x (64 MiB) and v5e/v6e

    cost = pl.CostEstimate(
        flops=2 * B * D * NUM_STEPS,
        transcendentals=B * NUM_STEPS,
        bytes_accessed=(B * D * 4 + NUM_STEPS * D_pad_w * 2
                        + NUM_STEPS * 4 + nb * 8 * 128 * 4),
    )

    kernel = functools.partial(
        _amp_scale_kernel,
        n_rows=B, n_cols=D, tb=TB, tk=TK, w_resident=w_resident)

    stats = pl.pallas_call(
        kernel,
        out_shape=jax.ShapeDtypeStruct((nb * 8, 128), jnp.float32),
        grid_spec=pltpu.PrefetchScalarGridSpec(
            num_scalar_prefetch=1,                          # label -> SMEM
            grid=(nb, nk),
            in_specs=[
                pl.BlockSpec((TB, TK), lambda i, k, lbl: (i, k)),        # x (f32, ragged tiles)
                w_spec,                                                   # W (bf16, lane-dense)
                pl.BlockSpec((1, NUM_STEPS), lambda i, k, lbl: (0, 0)),   # bias (resident)
            ],
            out_specs=pl.BlockSpec((8, 128), lambda i, k, lbl: (i, 0)),
            scratch_shapes=[pltpu.VMEM((TB, NUM_STEPS), jnp.float32)],
        ),
        compiler_params=pltpu.CompilerParams(
            dimension_semantics=("parallel", "arbitrary"),
            vmem_limit_bytes=vmem_limit,
        ),
        cost_estimate=cost,
    )(label_arr, x_flat, w_bf, bias2d)

    stats = stats.reshape(nb, 8, 128)
    ce = jnp.sum(stats[:, 0, 0]) / B
    # TODO(synk): torchmetrics multiclass_accuracy defaults to macro averaging over
    # classes; here we report the plain fraction-correct (micro) accuracy.
    acc = jnp.sum(stats[:, 0, 1]) / B

    return {
        "amp_scale_ce_loss": ce,
        "amp_scale_accuracy": acc,
    }


def scale_amp(key, x, prop, num_steps=NUM_STEPS):
    """JAX re-implementation of AmpScalePredictor.scale_amp (host glue, not a kernel)."""
    B, C, T = x.shape
    k_lbl, k_perm = jax.random.split(key)
    possible_scales = jnp.linspace(-2.0, 2.0, num_steps)
    scale_label = jax.random.randint(k_lbl, (), 0, num_steps, dtype=jnp.int32)
    scale = possible_scales[scale_label]
    n_scale = int(C * prop)
    channels_to_scale = jax.random.permutation(k_perm, C)[:n_scale]
    chan_mask = jnp.zeros((C,), dtype=bool).at[channels_to_scale].set(True)
    x_scaled = jnp.where(chan_mask[None, :, None], x * scale, x)
    return x_scaled, scale_label


if __name__ == "__main__":
    # Small shapes consistent with the module: x is (B, C, T), input_dim = C*T.
    B, C, T = 2, 4, 16
    input_dim = C * T
    prop = 0.5

    key = jax.random.PRNGKey(0)
    k_x, k_aug, k_w, k_b = jax.random.split(key, 4)

    x = jax.random.normal(k_x, (B, C, T), dtype=jnp.float32)
    x_scaled, scale_label = scale_amp(k_aug, x, prop)

    # Deterministic "PyTorch-like" Linear init: U(-1/sqrt(D), 1/sqrt(D)).
    bound = 1.0 / (input_dim ** 0.5)
    weight = jax.random.uniform(k_w, (input_dim, NUM_STEPS),
                                minval=-bound, maxval=bound, dtype=jnp.float32)
    bias = jax.random.uniform(k_b, (NUM_STEPS,),
                              minval=-bound, maxval=bound, dtype=jnp.float32)

    out = amp_scale_predictor_forward(x_scaled, scale_label, weight, bias)
    jax.block_until_ready(out)

    # Reference with the same bf16 rounding the kernel uses (f32 accumulation).
    x_flat = x_scaled.reshape(B, -1)
    z_ref = (x_flat.astype(jnp.bfloat16).astype(jnp.float32)
             @ weight.astype(jnp.bfloat16).astype(jnp.float32)) + bias
    logp = jax.nn.log_softmax(z_ref, axis=-1)
    ce_ref = -jnp.mean(logp[:, scale_label])
    acc_ref = jnp.mean((jnp.argmax(z_ref, axis=-1) == scale_label).astype(jnp.float32))

    assert jnp.allclose(out["amp_scale_ce_loss"], ce_ref, atol=2e-3, rtol=1e-3), (
        out["amp_scale_ce_loss"], ce_ref)
    assert jnp.allclose(out["amp_scale_accuracy"], acc_ref, atol=1e-6), (
        out["amp_scale_accuracy"], acc_ref)

    print("KERNEL_OK")
</pallas_src>

<mosaic_0001>
module attributes {stable_mosaic.version = 11 : i64} {
  func.func @_amp_scale_kernel(%arg0: i32, %arg1: i32, %arg2: memref<1xi32, #tpu.memory_space<smem>>, %arg3: memref<8x128xf32, #tpu.memory_space<vmem>>, %arg4: memref<16x128xbf16, #tpu.memory_space<vmem>>, %arg5: memref<1x16xf32, #tpu.memory_space<vmem>>, %arg6: memref<8x128xf32, #tpu.memory_space<vmem>>, %arg7: memref<8x16xf32, #tpu.memory_space<vmem>>) attributes {dimension_semantics = [#tpu.dimension_semantics<parallel>, #tpu.dimension_semantics<arbitrary>], iteration_bounds = array<i64: 1, 1>, scalar_prefetch = 1 : i64, scratch_operands = 1 : i64, tpu.core_type = #tpu.core_type<tc>, window_params = [{transform_indices = @transform_0, window_bounds = array<i64: 8, 128>}, {pipeline_mode = #tpu.pipeline_mode<synchronous>, transform_indices = @transform_1, window_bounds = array<i64: 16, 128>}, {pipeline_mode = #tpu.pipeline_mode<synchronous>, transform_indices = @transform_2, window_bounds = array<i64: 1, 16>}, {transform_indices = @transform_3, window_bounds = array<i64: 8, 128>}]} {
    %c0_i32 = arith.constant 0 : i32
    %0 = arith.cmpi eq, %arg1, %c0_i32 : i32
    %1 = arith.extui %0 : i1 to i32
    %c0_i32_0 = arith.constant 0 : i32
    %2 = arith.cmpi ne, %1, %c0_i32_0 : i32
    scf.if %2 {
      %cst = arith.constant 0.000000e+00 : f32
      %13 = vector.broadcast %cst : f32 to vector<8x16xf32>
      %c0_5 = arith.constant 0 : index
      %c0_6 = arith.constant 0 : index
      %14 = vector.load %arg7[%c0_5, %c0_6] : memref<8x16xf32, #tpu.memory_space<vmem>>, vector<8x16xf32>
      tpu.vector_store %arg7[%c0_5, %c0_6], %13 {strides = array<i32>} : memref<8x16xf32, #tpu.memory_space<vmem>>, vector<8x16xf32>,
    } else {
    }
    %c128_i32 = arith.constant 128 : i32
    %3 = arith.muli %arg1, %c128_i32 : i32
    %4 = tpu.assume_multiple %3, 128 : i32
    %c0 = arith.constant 0 : index
    %5 = arith.index_cast %4 : i32 to index
    %6 = vector.load %arg4[%c0, %5] : memref<16x128xbf16, #tpu.memory_space<vmem>>, vector<16x128xbf16>
    %c0_i32_1 = arith.constant 0 : i32
    %7 = arith.cmpi slt, %arg1, %c0_i32_1 : i32
    %8 = arith.extui %7 : i1 to i32
    %c0_i32_2 = arith.constant 0 : i32
    %9 = arith.cmpi ne, %8, %c0_i32_2 : i32
    scf.if %9 {
      %c0_5 = arith.constant 0 : index
      %c0_6 = arith.constant 0 : index
      %13 = vector.load %arg3[%c0_5, %c0_6] : memref<8x128xf32, #tpu.memory_space<vmem>>, vector<8x128xf32>
      %14 = arith.truncf %13 : vector<8x128xf32> to vector<8x128xbf16>
      %c0_7 = arith.constant 0 : index
      %c0_8 = arith.constant 0 : index
      %15 = vector.load %arg7[%c0_7, %c0_8] : memref<8x16xf32, #tpu.memory_space<vmem>>, vector<8x16xf32>
      %cst = arith.constant dense<0.000000e+00> : vector<8x16xf32>
      %16 = tpu.matmul %14, %6, %cst {dimension_numbers = #tpu.dot_dimension_numbers<[1], [1], [0], [0], [0, 0, 1, 0], [], []>} : vector<8x128xbf16>, vector<16x128xbf16>, vector<8x16xf32> -> vector<8x16xf32>
      %17 = arith.addf %15, %16 : vector<8x16xf32>
      %c0_9 = arith.constant 0 : index
      %c0_10 = arith.constant 0 : index
      %18 = vector.load %arg7[%c0_9, %c0_10] : memref<8x16xf32, #tpu.memory_space<vmem>>, vector<8x16xf32>
      tpu.vector_store %arg7[%c0_9, %c0_10], %17 {strides = array<i32>} : memref<8x16xf32, #tpu.memory_space<vmem>>, vector<8x16xf32>,
    } else {
    }
    %c0_i32_3 = arith.constant 0 : i32
    %10 = arith.cmpi eq, %arg1, %c0_i32_3 : i32
    %11 = arith.extui %10 : i1 to i32
    %c0_i32_4 = arith.constant 0 : i32
    %12 = arith.cmpi ne, %11, %c0_i32_4 : i32
    scf.if %12 {
      %c0_5 = arith.constant 0 : index
      %c0_6 = arith.constant 0 : index
      %13 = vector.load %arg3[%c0_5, %c0_6] : memref<8x128xf32, #tpu.memory_space<vmem>>, vector<8x128xf32>
      %14 = tpu.iota {dimensions = array<i32: 1>} : vector<8x128xi32>
      %c128_i32_7 = arith.constant 128 : i32
      %15 = arith.muli %arg1, %c128_i32_7 : i32
      %16 = vector.broadcast %15 : i32 to vector<8x128xi32>
      %17 = arith.addi %14, %16 : vector<8x128xi32>
      %c64_i32 = arith.constant 64 : i32
      %18 = vector.broadcast %c64_i32 : i32 to vector<8x128xi32>
      %19 = arith.cmpi slt, %17, %18 : vector<8x128xi32>
      %cst = arith.constant 0.000000e+00 : f32
      %20 = vector.broadcast %cst : f32 to vector<8x128xf32>
      %21 = arith.select %19, %13, %20 : vector<8x128xi1>, vector<8x128xf32>
      %22 = arith.truncf %21 : vector<8x128xf32> to vector<8x128xbf16>
      %c0_8 = arith.constant 0 : index
      %c0_9 = arith.constant 0 : index
      %23 = vector.load %arg7[%c0_8, %c0_9] : memref<8x16xf32, #tpu.memory_space<vmem>>, vector<8x16xf32>
      %cst_10 = arith.constant dense<0.000000e+00> : vector<8x16xf32>
      %24 = tpu.matmul %22, %6, %cst_10 {dimension_numbers = #tpu.dot_dimension_numbers<[1], [1], [0], [0], [0, 0, 1, 0], [], []>} : vector<8x128xbf16>, vector<16x128xbf16>, vector<8x16xf32> -> vector<8x16xf32>
      %25 = arith.addf %23, %24 : vector<8x16xf32>
      %c0_11 = arith.constant 0 : index
      %c0_12 = arith.constant 0 : index
      %26 = vector.load %arg7[%c0_11, %c0_12] : memref<8x16xf32, #tpu.memory_space<vmem>>, vector<8x16xf32>
      tpu.vector_store %arg7[%c0_11, %c0_12], %25 {strides = array<i32>} : memref<8x16xf32, #tpu.memory_space<vmem>>, vector<8x16xf32>,
      %c0_13 = arith.constant 0 : index
      %c0_14 = arith.constant 0 : index
      %27 = vector.load %arg7[%c0_13, %c0_14] : memref<8x16xf32, #tpu.memory_space<vmem>>, vector<8x16xf32>
      %c0_15 = arith.constant 0 : index
      %c0_16 = arith.constant 0 : index
      %28 = vector.load %arg5[%c0_15, %c0_16] : memref<1x16xf32, #tpu.memory_space<vmem>>, vector<1x16xf32>
      %29 = vector.broadcast %28 : vector<1x16xf32> to vector<8x16xf32>
      %30 = arith.addf %27, %29 : vector<8x16xf32>
      %c0_17 = arith.constant 0 : index
      %31 = memref.load %arg2[%c0_17] : memref<1xi32, #tpu.memory_space<smem>>
      %32 = tpu.iota {dimensions = array<i32: 1>} : vector<8x16xi32>
      %cst_18 = arith.constant dense<0xFF800000> : vector<8xf32>
      %33 = vector.multi_reduction <maximumf>, %30, %cst_18 [1] : vector<8x16xf32> to vector<8xf32>
      %34 = vector.shape_cast %33 : vector<8xf32> to vector<8x1xf32>
      %35 = vector.broadcast %34 : vector<8x1xf32> to vector<8x16xf32>
      %36 = arith.subf %30, %35 : vector<8x16xf32>
      %37 = math.exp %36 : vector<8x16xf32>
      %cst_19 = arith.constant dense<0.000000e+00> : vector<8xf32>
      %38 = vector.multi_reduction <add>, %37, %cst_19 [1] : vector<8x16xf32> to vector<8xf32>
      %39 = vector.shape_cast %38 : vector<8xf32> to vector<8x1xf32>
      %40 = math.log %39 : vector<8x1xf32>
      %41 = arith.addf %34, %40 : vector<8x1xf32>
      %42 = vector.broadcast %31 : i32 to vector<8x16xi32>
      %43 = arith.cmpi eq, %32, %42 : vector<8x16xi32>
      %cst_20 = arith.constant 0.000000e+00 : f32
      %44 = vector.broadcast %cst_20 : f32 to vector<8x16xf32>
      %45 = arith.select %43, %30, %44 : vector<8x16xi1>, vector<8x16xf32>
      %cst_21 = arith.constant dense<0.000000e+00> : vector<8xf32>
      %46 = vector.multi_reduction <add>, %45, %cst_21 [1] : vector<8x16xf32> to vector<8xf32>
      %47 = vector.shape_cast %46 : vector<8xf32> to vector<8x1xf32>
      %48 = arith.subf %41, %47 : vector<8x1xf32>
      %49 = vector.broadcast %34 : vector<8x1xf32> to vector<8x16xf32>
      %50 = arith.cmpf oeq, %30, %49 : vector<8x16xf32>
      %c16_i32 = arith.constant 16 : i32
      %51 = vector.broadcast %c16_i32 : i32 to vector<8x16xi32>
      %52 = arith.select %50, %32, %51 : vector<8x16xi1>, vector<8x16xi32>
      %cst_22 = arith.constant dense<2147483647> : vector<8xi32>
      %53 = vector.multi_reduction <minsi>, %52, %cst_22 [1] : vector<8x16xi32> to vector<8xi32>
      %54 = vector.shape_cast %53 : vector<8xi32> to vector<8x1xi32>
      %55 = vector.broadcast %31 : i32 to vector<8x1xi32>
      %56 = arith.cmpi eq, %54, %55 : vector<8x1xi32>
      %57 = arith.extui %56 : vector<8x1xi1> to vector<8x1xi32>
      %58 = arith.sitofp %57 : vector<8x1xi32> to vector<8x1xf32>
      %59 = tpu.iota {dimensions = array<i32: 0>} : vector<8x1xi32>
      %c8_i32 = arith.constant 8 : i32
      %60 = arith.muli %arg0, %c8_i32 : i32
      %61 = vector.broadcast %60 : i32 to vector<8x1xi32>
      %62 = arith.addi %59, %61 : vector<8x1xi32>
      %c2_i32 = arith.constant 2 : i32
      %63 = vector.broadcast %c2_i32 : i32 to vector<8x1xi32>
      %64 = arith.cmpi slt, %62, %63 : vector<8x1xi32>
      %cst_23 = arith.constant 0.000000e+00 : f32
      %65 = vector.broadcast %cst_23 : f32 to vector<8x1xf32>
      %66 = arith.select %64, %48, %65 : vector<8x1xi1>, vector<8x1xf32>
      %67 = vector.shape_cast %66 : vector<8x1xf32> to vector<1x8x1xf32>
      %cst_24 = arith.constant dense<0.000000e+00> : vector<1xf32>
      %68 = vector.multi_reduction <add>, %67, %cst_24 [1, 2] : vector<1x8x1xf32> to vector<1xf32>
      %69 = vector.shape_cast %68 : vector<1xf32> to vector<1x1x1xf32>
      %70 = vector.extract %69[0, 0, 0] : f32 from vector<1x1x1xf32>
      %71 = vector.broadcast %70 : f32 to vector<1x1xf32>
      %cst_25 = arith.constant 0.000000e+00 : f32
      %72 = vector.broadcast %cst_25 : f32 to vector<8x1xf32>
      %73 = arith.select %64, %58, %72 : vector<8x1xi1>, vector<8x1xf32>
      %74 = vector.shape_cast %73 : vector<8x1xf32> to vector<1x8x1xf32>
      %cst_26 = arith.constant dense<0.000000e+00> : vector<1xf32>
      %75 = vector.multi_reduction <add>, %74, %cst_26 [1, 2] : vector<1x8x1xf32> to vector<1xf32>
      %76 = vector.shape_cast %75 : vector<1xf32> to vector<1x1x1xf32>
      %77 = vector.extract %76[0, 0, 0] : f32 from vector<1x1x1xf32>
      %78 = vector.broadcast %77 : f32 to vector<1x1xf32>
      %79 = tpu.iota {dimensions = array<i32: 0>} : vector<8x128xi32>
      %80 = tpu.iota {dimensions = array<i32: 1>} : vector<8x128xi32>
      %c0_i32_27 = arith.constant 0 : i32
      %81 = vector.broadcast %c0_i32_27 : i32 to vector<8x128xi32>
      %82 = arith.cmpi eq, %79, %81 : vector<8x128xi32>
      %c0_i32_28 = arith.constant 0 : i32
      %83 = vector.broadcast %c0_i32_28 : i32 to vector<8x128xi32>
      %84 = arith.cmpi eq, %80, %83 : vector<8x128xi32>
      %85 = arith.andi %82, %84 : vector<8x128xi1>
      %cst_29 = arith.constant 0.000000e+00 : f32
      %86 = vector.shape_cast %71 : vector<1x1xf32> to vector<1x1xf32>
      %87 = vector.broadcast %86 : vector<1x1xf32> to vector<8x128xf32>
      %88 = vector.broadcast %cst_29 : f32 to vector<8x128xf32>
      %89 = arith.select %85, %87, %88 : vector<8x128xi1>, vector<8x128xf32>
      %c0_i32_30 = arith.constant 0 : i32
      %90 = vector.broadcast %c0_i32_30 : i32 to vector<8x128xi32>
      %91 = arith.cmpi eq, %79, %90 : vector<8x128xi32>
      %c1_i32 = arith.constant 1 : i32
      %92 = vector.broadcast %c1_i32 : i32 to vector<8x128xi32>
      %93 = arith.cmpi eq, %80, %92 : vector<8x128xi32>
      %94 = arith.andi %91, %93 : vector<8x128xi1>
      %95 = vector.shape_cast %78 : vector<1x1xf32> to vector<1x1xf32>
      %96 = vector.broadcast %95 : vector<1x1xf32> to vector<8x128xf32>
      %97 = arith.select %94, %96, %89 : vector<8x128xi1>, vector<8x128xf32>
      %c0_31 = arith.constant 0 : index
      %c0_32 = arith.constant 0 : index
      %98 = vector.load %arg6[%c0_31, %c0_32] : memref<8x128xf32, #tpu.memory_space<vmem>>, vector<8x128xf32>
      tpu.vector_store %arg6[%c0_31, %c0_32], %97 {strides = array<i32>} : memref<8x128xf32, #tpu.memory_space<vmem>>, vector<8x128xf32>,
    } else {
    }
    return
  }
  func.func @transform_0(%arg0: i32, %arg1: i32, %arg2: memref<1xi32, #tpu.memory_space<smem>>) -> (i32, i32) {
    %c0_i32 = arith.constant 0 : i32
    return %arg0, %arg1 : i32, i32
  }
  func.func @transform_1(%arg0: i32, %arg1: i32, %arg2: memref<1xi32, #tpu.memory_space<smem>>) -> (i32, i32) {
    %c0_i32 = arith.constant 0 : i32
    %c0_i32_0 = arith.constant 0 : i32
    %c0_i32_1 = arith.constant 0 : i32
    return %c0_i32, %c0_i32_0 : i32, i32
  }
  func.func @transform_2(%arg0: i32, %arg1: i32, %arg2: memref<1xi32, #tpu.memory_space<smem>>) -> (i32, i32) {
    %c0_i32 = arith.constant 0 : i32
    %c0_i32_0 = arith.constant 0 : i32
    %c0_i32_1 = arith.constant 0 : i32
    return %c0_i32, %c0_i32_0 : i32, i32
  }
  func.func @transform_3(%arg0: i32, %arg1: i32, %arg2: memref<1xi32, #tpu.memory_space<smem>>) -> (i32, i32) {
    %c0_i32 = arith.constant 0 : i32
    %c0_i32_0 = arith.constant 0 : i32
    return %arg0, %c0_i32 : i32, i32
  }
}

</mosaic_0001>

<llo_original>
// kernel: amp_scale_predictor_forward.1
$region0: #{amp_scale_predictor_forward.1}
  #allocation0 [shape = 'u32[]', space=smem, size = 0x4, offset = 0x4, fixed_abs, tag = 'smem constant byte address 0x4 - core index']
  #allocation1 [shape = 'u32[144,128]{1,0:T(1,128)}', space=vmem, size = 0x12000, scoped, tag = 'internal scratch']
  #allocation2 [shape = 'f32[8,16]{1,0:T(8,128)}', space=vmem, size = 0x1000, scoped, tag = 'scratch operand']
  #allocation3 [shape = 's32[1]{0}', space=sflag, size = 0x4, scoped, tag = 'scoped memory for amp_scale_predictor_forward.1']
  #allocation4 [shape = 's32[1]{0:T(128)S(6)}', space=smem, size = 0x200, scoped, tag = 'prefetched SMEM operand 0']
  %s0 = inlined_call_operand.<no memory space> [shape: s32[1], index: 0, kind: input, shape index: {}]
  %s1 = inlined_call_operand.vmem [shape: f32[2,64], index: 1, kind: input, shape index: {}]
  %s2 = inlined_call_operand.vmem [shape: bf16[16,128], index: 2, kind: input, shape index: {}]
  %s3 = inlined_call_operand.vmem [shape: f32[1,16], index: 3, kind: input, shape index: {}]
  %s4 = inlined_call_operand.vmem [shape: f32[8,128], index: 4, kind: output, shape index: {}]
  %s5 = sld [smem:[#allocation0]]
  $region34: #{amp_scale_predictor_forward.1} parent=0
    _
  %s7 = ssub.s32 1, %s5
  %s8 = scalar_select 0, %s7, %s5
  %9 = sst [smem:[#allocation4]] %s0
  // Predicated region
  $region2: #{amp_scale_predictor_forward.1} parent=0 // pred_check
    _
  $region3: #{amp_scale_predictor_forward.1} parent=0 // pred_check_branch
    %11 = sbr.rel (0) target = $region5
  $region4: #{amp_scale_predictor_forward.1} parent=0 // pred_region
    _
  $region5: #{amp_scale_predictor_forward.1} parent=0 // pred_fallthru
    _
  // Predicated region
  $region6: #{amp_scale_predictor_forward.1} parent=0 // pred_check
    _
  $region7: #{amp_scale_predictor_forward.1} parent=0 // pred_check_branch
    %13 = sbr.rel (0) target = $region9
  $region8: #{amp_scale_predictor_forward.1} parent=0 // pred_region
    _
  $region9: #{amp_scale_predictor_forward.1} parent=0 // pred_fallthru
    _
  // Predicated region
  $region10: #{amp_scale_predictor_forward.1} parent=0 // pred_check
    _
  $region11: #{amp_scale_predictor_forward.1} parent=0 // pred_check_branch
    %15 = sbr.rel (0) target = $region13
  $region12: #{amp_scale_predictor_forward.1} parent=0 // pred_region
    _
  $region13: #{amp_scale_predictor_forward.1} parent=0 // pred_fallthru
    _
  %p17 = scmp.eq.s32.totalorder 0, 0
  // Predicated region
  $region14: #{amp_scale_predictor_forward.1} parent=0 // pred_check
    %p18 = pneg %p17
  $region15: #{amp_scale_predictor_forward.1} parent=0 // pred_check_branch
    %20 = sbr.rel (%p18) target = $region17
  $region16: #{amp_scale_predictor_forward.1} parent=0 // pred_region
    %vm21 = vcmask 130048
    %22 = vst.msk [vmem:[#allocation2] sm:$0xff] %vm21, 0.0
  $region17: #{amp_scale_predictor_forward.1} parent=0 // pred_fallthru
    _
  %s23 = smul.u32 0, 128
  %s24 = sshra.s32 %s23, 7
  %s25 = sand.u32 %s23, 127
  %s26 = smul.addr %s24, 4
  %s27 = scalar_lea.vmem %s2, %s26
  %v28 = vld [vmem:[%s27] sm:$0xf]
  %v29 = vld [vmem:[%s27 + $0x4] sm:$0xf]
  %p30 = scmp.lt.s32.totalorder 0, 0
  // Predicated region
  $region18: #{amp_scale_predictor_forward.1} parent=0 // pred_check
    %p31 = pneg %p30
  $region19: #{amp_scale_predictor_forward.1} parent=0 // pred_check_branch
    %33 = sbr.rel (%p31) target = $region21
  $region20: #{amp_scale_predictor_forward.1} parent=0 // pred_region
    %v34 = vld [vmem:[%s1] sm:$0xff]
    %v35 = vpack.c.bf16 %v34, %v34
    %v36 = vld [vmem:[#allocation2] sm:$0xff]
    %v39 = vunpack.c.l.b16 %v28
    %v40 = vunpack.c.l.b16 %v29
    %v41 = vpack.c.b16 %v40, %v39
    %43 = vmatprep.subr.bf16.mxu0 0
    %44 = vmatpush1.bf16.xpose.msra.mxu0 %v41
    %45 = vmatprep.subr.bf16.mxu0 0
    %46 = vmatpush1.bf16.xpose.msra.mxu0 0
    %47 = vmatprep.subr.bf16.mxu0 0
    %48 = vmatpush1.bf16.xpose.msra.mxu0 0
    %49 = vmatprep.subr.bf16.mxu0 0
    %50 = vmatpush1.bf16.xpose.msra.mxu0 0
    %51 = vmatprep.subr.bf16.mxu0 0
    %52 = vmatpush1.bf16.xpose.msra.mxu0 0
    %53 = vmatprep.subr.bf16.mxu0 0
    %54 = vmatpush1.bf16.xpose.msra.mxu0 0
    %55 = vmatprep.subr.bf16.mxu0 0
    %56 = vmatpush1.bf16.xpose.msra.mxu0 0
    %57 = vmatprep.subr.bf16.mxu0 0
    %58 = vmatpush1.bf16.xpose.msra.mxu0 0
    %59 = vmatprep.subr.bf16.mxu0 0
    %60 = vmatpush1.bf16.xpose.msra.mxu0 0
    %61 = vmatprep.subr.bf16.mxu0 0
    %62 = vmatpush1.bf16.xpose.msra.mxu0 0
    %63 = vmatprep.subr.bf16.mxu0 0
    %64 = vmatpush1.bf16.xpose.msra.mxu0 0
    %65 = vmatprep.subr.bf16.mxu0 0
    %66 = vmatpush1.bf16.xpose.msra.mxu0 0
    %67 = vmatprep.subr.bf16.mxu0 0
    %68 = vmatpush1.bf16.xpose.msra.mxu0 0
    %69 = vmatprep.subr.bf16.mxu0 0
    %70 = vmatpush1.bf16.xpose.msra.mxu0 0
    %71 = vmatprep.subr.bf16.mxu0 0
    %72 = vmatpush1.bf16.xpose.msra.mxu0 0
    %73 = vmatprep.subr.bf16.mxu0 0
    %74 = vmatpush1.bf16.xpose.msra.mxu0 0
    %75 = vmatprep.mubr.bf16.mxu0 0
    %76 = vmatmul.mubr.bf16.gmra.mrb[0].mxu0 %v35
    %v77 = vpop.f32.mrb[0].mxu0
    %v78 = vadd.f32 0.0, %v77
    %v79 = vpop.f32.mrb[0].mxu0
    %v80 = vpop.f32.mrb[0].mxu0
    %v81 = vpop.f32.mrb[0].mxu0
    %82 = vdwg.mxu0
    %v83 = vadd.f32 %v36, %v78
    %vm84 = vcmask 130048
    %85 = vst.msk [vmem:[#allocation2] sm:$0xff] %vm84, %v83
  $region21: #{amp_scale_predictor_forward.1} parent=0 // pred_fallthru
    _
  // Predicated region
  $region22: #{amp_scale_predictor_forward.1} parent=0 // pred_check
    %p86 = pneg %p17
  $region23: #{amp_scale_predictor_forward.1} parent=0 // pred_check_branch
    %88 = sbr.rel (%p86) target = $region25
  $region24: #{amp_scale_predictor_forward.1} parent=0 // pred_region
    %v89 = vld [vmem:[%s1] sm:$0xff]
    %v90 = vlaneseq
    %v91 = vand.u32 %v90, 127
    %v92 = vstv %s23
    %v93 = vadd.s32 %v91, %v92
    %vm94 = vcmp.lt.s32.totalorder %v93, 64
    %v95 = vsel %vm94, %v89, 0.0
    %v96 = vpack.c.bf16 %v95, %v95
    %v97 = vld [vmem:[#allocation2] sm:$0xff]
    %v100 = vunpack.c.l.b16 %v28
    %v101 = vunpack.c.l.b16 %v29
    %v102 = vpack.c.b16 %v101, %v100
    %104 = vmatprep.subr.bf16.mxu0 0
    %105 = vmatpush1.bf16.xpose.msra.mxu0 %v102
    %106 = vmatprep.subr.bf16.mxu0 0
    %107 = vmatpush1.bf16.xpose.msra.mxu0 0
    %108 = vmatprep.subr.bf16.mxu0 0
    %109 = vmatpush1.bf16.xpose.msra.mxu0 0
    %110 = vmatprep.subr.bf16.mxu0 0
    %111 = vmatpush1.bf16.xpose.msra.mxu0 0
    %112 = vmatprep.subr.bf16.mxu0 0
    %113 = vmatpush1.bf16.xpose.msra.mxu0 0
    %114 = vmatprep.subr.bf16.mxu0 0
    %115 = vmatpush1.bf16.xpose.msra.mxu0 0
    %116 = vmatprep.subr.bf16.mxu0 0
    %117 = vmatpush1.bf16.xpose.msra.mxu0 0
    %118 = vmatprep.subr.bf16.mxu0 0
    %119 = vmatpush1.bf16.xpose.msra.mxu0 0
    %120 = vmatprep.subr.bf16.mxu0 0
    %121 = vmatpush1.bf16.xpose.msra.mxu0 0
    %122 = vmatprep.subr.bf16.mxu0 0
    %123 = vmatpush1.bf16.xpose.msra.mxu0 0
    %124 = vmatprep.subr.bf16.mxu0 0
    %125 = vmatpush1.bf16.xpose.msra.mxu0 0
    %126 = vmatprep.subr.bf16.mxu0 0
    %127 = vmatpush1.bf16.xpose.msra.mxu0 0
    %128 = vmatprep.subr.bf16.mxu0 0
    %129 = vmatpush1.bf16.xpose.msra.mxu0 0
    %130 = vmatprep.subr.bf16.mxu0 0
    %131 = vmatpush1.bf16.xpose.msra.mxu0 0
    %132 = vmatprep.subr.bf16.mxu0 0
    %133 = vmatpush1.bf16.xpose.msra.mxu0 0
    %134 = vmatprep.subr.bf16.mxu0 0
    %135 = vmatpush1.bf16.xpose.msra.mxu0 0
    %136 = vmatprep.mubr.bf16.mxu0 0
    %137 = vmatmul.mubr.bf16.gmra.mrb[0].mxu0 %v96
    %v138 = vpop.f32.mrb[0].mxu0
    %v139 = vadd.f32 0.0, %v138
    %v140 = vpop.f32.mrb[0].mxu0
    %v141 = vpop.f32.mrb[0].mxu0
    %v142 = vpop.f32.mrb[0].mxu0
    %143 = vdwg.mxu0
    %v144 = vadd.f32 %v97, %v139
    %vm145 = vcmask 130048
    %146 = vst.msk [vmem:[#allocation2] sm:$0xff] %vm145, %v144
    %v147 = vld [vmem:[#allocation2] sm:$0xff]
    %v148 = vld [vmem:[%s3] sm:$0x1]
    %v150 = vlaneseq
    %v151 = vshrl.u32 %v150, 7
    %v152 = vsub.s32 0, %v151
    %v153 = vrot.slane %v148, %v152
    %v155 = vadd.f32 %v147, %v153
    %s156 = sld [smem:[#allocation4]]
    %v157 = vsel %vm145, %v155, -inf
    %158 = vmax.xlane.f32.xlu0 %v157
    %v159 = vpop.xlane.xlu0 %158
    %v160 = vsub.f32 %v155, %v159
    %v161 = vmul.f32 %v160, 1.442695
    %v162 = vpow.pop %v161
    %v163 = vsel %vm145, %v162, 0.0
    %164 = vadd.xlane.f32.xlu0 %v163
    %v165 = vpop.xlane.xlu0 %164
    %v166 = vlog2.pop %v165
    %v167 = vmul.f32 %v166, 0.6931472
    %v168 = vadd.f32 %v159, %v167
    %v169 = vstv %s156
    %vm170 = vcmp.eq.s32.totalorder %v91, %v169
    %v171 = vsel %vm170, %v155, 0.0
    %v172 = vsel %vm145, %v171, 0.0
    %173 = vadd.xlane.f32.xlu0 %v172
    %v174 = vpop.xlane.xlu0 %173
    %v175 = vsub.f32 %v168, %v174
    %vm176 = vcmp.eq.f32.partialorder %v155, %v159
    %v177 = vsel %vm176, %v91, 16
    %v178 = vsel %vm145, %v177, 2147483647
    %v179 = vand.u32 %v178, 65535
    %v180 = vshra.s32 %v178, 16
    %v181 = vcvt.s32.f32 %v179
    %v182 = vcvt.s32.f32 %v180
    %183 = vmin.xlane.f32.xlu0 %v182
    %v184 = vpop.xlane.xlu0 %183
    %vm185 = vcmp.eq.f32.partialorder %v182, %v184
    %v186 = vsel %vm185, %v181, inf
    %187 = vmin.xlane.f32.xlu0 %v186
    %v188 = vpop.xlane.xlu0 %187
    %v189 = vcvt.f32.s32 %v188
    %v190 = vcvt.f32.s32 %v184
    %v191 = vshll.u32 %v190, 16
    %v192 = vadd.s32 %v191, %v189
    %vm193 = vcmp.eq.s32.totalorder %v192, %v169
    %v194 = vsel %vm193, 1, 0
    %v195 = vcvt.s32.f32 %v194
    %v196 = vlaneseq
    %v197 = vshrl.u32 %v196, 7
    %s198 = smul.u32 0, 8
    %v199 = vstv %s198
    %v200 = vadd.s32 %v197, %v199
    %vm201 = vcmp.lt.s32.totalorder %v200, 2
    %v202 = vsel %vm201, %v175, 0.0
    %vm203 = vcmask 7168
    %v204 = vsel %vm203, %v202, 0.0
    %205 = vadd.xlane.f32.xlu0 %v204
    %v206 = vpop.xlane.xlu0 %205
    %v207 = vrot.slane %v206, 4
    %v208 = vadd.f32 %v206, %v207
    %v209 = vrot.slane %v208, 2
    %v210 = vadd.f32 %v208, %v209
    %v211 = vrot.slane %v210, 1
    %v212 = vadd.f32 %v210, %v211
    %s213 = vtos %v212
    %v214 = vsel %vm201, %v195, 0.0
    %v215 = vsel %vm203, %v214, 0.0
    %216 = vadd.xlane.f32.xlu0 %v215
    %v217 = vpop.xlane.xlu0 %216
    %v218 = vrot.slane %v217, 4
    %v219 = vadd.f32 %v217, %v218
    %v220 = vrot.slane %v219, 2
    %v221 = vadd.f32 %v219, %v220
    %v222 = vrot.slane %v221, 1
    %v223 = vadd.f32 %v221, %v222
    %s224 = vtos %v223
    %vm225 = vcmp.eq.s32.totalorder %v197, 0
    %vm226 = vcmp.eq.s32.totalorder %v91, 0
    %vm227 = vmand %vm225, %vm226
    %v228 = vstv %s213
    %v229 = vsel %vm227, %v228, 0.0
    %vm230 = vcmp.eq.s32.totalorder %v91, 1
    %vm231 = vmand %vm225, %vm230
    %v232 = vstv %s224
    %v233 = vsel %vm231, %v232, %v229
    %234 = vst [vmem:[%s4] sm:$0xff] %v233
  $region25: #{amp_scale_predictor_forward.1} parent=0 // pred_fallthru
    _
  // Predicated region
  $region26: #{amp_scale_predictor_forward.1} parent=0 // pred_check
    _
  $region27: #{amp_scale_predictor_forward.1} parent=0 // pred_check_branch
    %236 = sbr.rel (0) target = $region29
  $region28: #{amp_scale_predictor_forward.1} parent=0 // pred_region
    _
  $region29: #{amp_scale_predictor_forward.1} parent=0 // pred_fallthru
    _
  // Predicated region
  $region30: #{amp_scale_predictor_forward.1} parent=0 // pred_check
    _
  $region31: #{amp_scale_predictor_forward.1} parent=0 // pred_check_branch
    %238 = sbr.rel (0) target = $region33
  $region32: #{amp_scale_predictor_forward.1} parent=0 // pred_region
    _
  $region33: #{amp_scale_predictor_forward.1} parent=0 // pred_fallthru
    _

</llo_original>
